<compile_context>
chip_gen: v7x
topology: tpu7x:2x2x1
jax: 0.10.0
libtpu: 0.0.40
codegen_flags: <defaults>
</compile_context>

<pallas_src>
import jax
import jax.numpy as jnp
from jax.experimental import pallas as pl
from jax.experimental.pallas import tpu as pltpu


def _round_up(x, m):
    return (x + m - 1) // m * m


def _largest_divisor(n, granularity, cap):
    """Largest d <= cap with d % granularity == 0 and n % d == 0 (n % granularity == 0)."""
    cap = max(granularity, min(cap, n))
    for m in range(cap // granularity, 0, -1):
        d = m * granularity
        if n % d == 0:
            return d
    return granularity


def _sublane(dtype):
    # f32 -> 8, bf16/f16 -> 16, int8/fp8 -> 32 sublanes
    return max(8, 32 // max(jnp.dtype(dtype).itemsize, 1))


def _mse_partial_kernel(yhat_ref, y_ref, out_ref, acc_ref):
    """Grid = (row_tiles, col_tiles); col axis is the (sequential) reduction axis."""
    j = pl.program_id(1)

    @pl.when(j == 0)
    def _init():
        acc_ref[...] = jnp.zeros_like(acc_ref)

    # Cast in-register (inputs stream HBM->VMEM in native dtype); pure VPU work.
    d = yhat_ref[...].astype(jnp.float32) - y_ref[...].astype(jnp.float32)
    acc_ref[...] += d * d

    # Single cross-lane reduce, once per row tile (scalar partial output).
    @pl.when(j == pl.num_programs(1) - 1)
    def _flush():
        out_ref[0, 0] = jnp.sum(acc_ref[...])


def mse_loss(yhat, y, *, per_block_budget_bytes=None):
    """sum((yhat - y)^2) / y.shape[0]  ==  nn.MSELoss(reduction='none') + sum/len."""
    assert yhat.shape == y.shape, (yhat.shape, y.shape)
    n = y.shape[0]                      # torch: len(y)
    b = yhat.shape[0]
    f = 1
    for s in yhat.shape[1:]:
        f *= s
    f = max(f, 1)

    # Keep native dtype (no wrapper-side astype -> no extra HBM pass).
    yh2 = yhat.reshape(b, f)
    y2 = y.reshape(b, f)

    itemsize = max(jnp.dtype(yhat.dtype).itemsize, jnp.dtype(y.dtype).itemsize)
    sub = max(_sublane(yhat.dtype), _sublane(y.dtype))

    # Pad only to (sublane, 128) granularity; skip entirely if already aligned.
    b_pad = _round_up(b, sub)
    f_pad = _round_up(f, 128)
    if (b_pad, f_pad) != (b, f):
        pad = ((0, b_pad - b), (0, f_pad - f))
        yh2 = jnp.pad(yh2, pad)
        y2 = jnp.pad(y2, pad)

    # Generation-aware tile budget (bytes of input dtype per input block).
    try:
        vmem_cap = int(pltpu.get_tpu_info().vmem_capacity_bytes)
    except Exception:  # pragma: no cover - conservative fallback
        vmem_cap = 64 << 20
    if per_block_budget_bytes is None:
        # 4 MiB blocks on v5e/v6e/v7x; also cap f32 accumulator at <= 8 MiB.
        per_block_budget = min(4 << 20, vmem_cap // 16, (2 << 20) * itemsize)
    else:
        per_block_budget = int(per_block_budget_bytes)
    per_block_budget = max(per_block_budget, sub * 128 * itemsize)

    # Tiles must divide the (lightly) padded shape -> no pad-to-tile round trip.
    tf = _largest_divisor(f_pad, 128, max(128, per_block_budget // (sub * itemsize)))
    tm = _largest_divisor(b_pad, sub, max(sub, per_block_budget // (tf * itemsize)))

    grid = (b_pad // tm, f_pad // tf)
    num_row_tiles = grid[0]

    # Raise the scoped VMEM limit (v5e default is only 16 MiB) but stay well
    # under v7x's 64 MiB physical VMEM.
    vmem_limit = int(min(64 << 20, max(32 << 20, vmem_cap // 2)))

    partials = pl.pallas_call(
        _mse_partial_kernel,
        out_shape=jax.ShapeDtypeStruct((num_row_tiles, 1), jnp.float32),
        grid=grid,
        in_specs=[
            pl.BlockSpec((tm, tf), lambda i, j: (i, j)),
            pl.BlockSpec((tm, tf), lambda i, j: (i, j)),
        ],
        # One scalar partial per row tile -> row axis can be "parallel" (megacore).
        out_specs=pl.BlockSpec((1, 1), lambda i, j: (i, 0),
                               memory_space=pltpu.MemorySpace.SMEM),
        scratch_shapes=[pltpu.VMEM((tm, tf), jnp.float32)],
        compiler_params=pltpu.CompilerParams(
            dimension_semantics=("parallel", "arbitrary"),
            vmem_limit_bytes=vmem_limit),
    )(yh2, y2)

    # Final tiny reduction + 1/len(y) scale in the wrapper.
    return jnp.sum(partials) / jnp.float32(n)


def _reference_loss(yhat, y):
    # pure-JAX mirror of the PyTorch forward (math in f32)
    d = yhat.astype(jnp.float32) - y.astype(jnp.float32)
    return jnp.sum(d * d) / y.shape[0]


if __name__ == "__main__":
    key = jax.random.PRNGKey(0)
    k1, k2, k3, k4 = jax.random.split(key, 4)

    # 1) small f32 case consistent with the module (single-block fast path)
    shape = (2, 4, 16, 16)
    yhat = jax.random.normal(k1, shape, dtype=jnp.float32)
    y = jax.random.normal(k2, shape, dtype=jnp.float32)
    loss = mse_loss(yhat, y)
    jax.block_until_ready(loss)
    ref = _reference_loss(yhat, y)
    assert jnp.allclose(loss, ref, atol=1e-4, rtol=1e-4), (loss, ref)

    # 2) bf16 inputs streamed in native dtype (16-sublane row alignment)
    yhat_bf = yhat.astype(jnp.bfloat16)
    y_bf = y.astype(jnp.bfloat16)
    loss_bf = mse_loss(yhat_bf, y_bf)
    jax.block_until_ready(loss_bf)
    ref_bf = _reference_loss(yhat_bf, y_bf)
    assert jnp.allclose(loss_bf, ref_bf, atol=1e-4, rtol=1e-4), (loss_bf, ref_bf)

    # 3) multi-tile grid path (forced tiny tile budget -> exercises the
    #    init/accumulate/flush pipeline and per-row-tile partial outputs)
    shape2 = (40, 3, 16, 16)
    yhat2 = jax.random.normal(k3, shape2, dtype=jnp.float32)
    y2 = jax.random.normal(k4, shape2, dtype=jnp.float32)
    loss2 = mse_loss(yhat2, y2, per_block_budget_bytes=4096)
    jax.block_until_ready(loss2)
    ref2 = _reference_loss(yhat2, y2)
    assert jnp.allclose(loss2, ref2, atol=1e-4, rtol=1e-4), (loss2, ref2)

    print("KERNEL_OK")
</pallas_src>

<mosaic_0001>
module attributes {stable_mosaic.version = 11 : i64} {
  func.func @_mse_partial_kernel(%arg0: i32, %arg1: i32, %arg2: memref<8x1024xf32, #tpu.memory_space<vmem>>, %arg3: memref<8x1024xf32, #tpu.memory_space<vmem>>, %arg4: memref<1x1xf32, #tpu.memory_space<smem>>, %arg5: memref<8x1024xf32, #tpu.memory_space<vmem>>) attributes {dimension_semantics = [#tpu.dimension_semantics<parallel>, #tpu.dimension_semantics<arbitrary>], iteration_bounds = array<i64: 1, 1>, scalar_prefetch = 0 : i64, scratch_operands = 1 : i64, tpu.core_type = #tpu.core_type<tc>, window_params = [{transform_indices = @transform_0, window_bounds = array<i64: 8, 1024>}, {transform_indices = @transform_1, window_bounds = array<i64: 8, 1024>}, {transform_indices = @transform_2, window_bounds = array<i64: 1, 1>}]} {
    %c0_i32 = arith.constant 0 : i32
    %0 = arith.cmpi eq, %arg1, %c0_i32 : i32
    %1 = arith.extui %0 : i1 to i32
    %c0_i32_0 = arith.constant 0 : i32
    %2 = arith.cmpi ne, %1, %c0_i32_0 : i32
    scf.if %2 {
      %cst = arith.constant 0.000000e+00 : f32
      %13 = vector.broadcast %cst : f32 to vector<8x1024xf32>
      %c0_10 = arith.constant 0 : index
      %c0_11 = arith.constant 0 : index
      %14 = vector.load %arg5[%c0_10, %c0_11] : memref<8x1024xf32, #tpu.memory_space<vmem>>, vector<8x1024xf32>
      tpu.vector_store %arg5[%c0_10, %c0_11], %13 {strides = array<i32>} : memref<8x1024xf32, #tpu.memory_space<vmem>>, vector<8x1024xf32>,
    } else {
    }
    %c0 = arith.constant 0 : index
    %c0_1 = arith.constant 0 : index
    %3 = vector.load %arg2[%c0, %c0_1] : memref<8x1024xf32, #tpu.memory_space<vmem>>, vector<8x1024xf32>
    %c0_2 = arith.constant 0 : index
    %c0_3 = arith.constant 0 : index
    %4 = vector.load %arg3[%c0_2, %c0_3] : memref<8x1024xf32, #tpu.memory_space<vmem>>, vector<8x1024xf32>
    %5 = arith.subf %3, %4 : vector<8x1024xf32>
    %c0_4 = arith.constant 0 : index
    %c0_5 = arith.constant 0 : index
    %6 = vector.load %arg5[%c0_4, %c0_5] : memref<8x1024xf32, #tpu.memory_space<vmem>>, vector<8x1024xf32>
    %7 = arith.mulf %5, %5 : vector<8x1024xf32>
    %8 = arith.addf %6, %7 : vector<8x1024xf32>
    %c0_6 = arith.constant 0 : index
    %c0_7 = arith.constant 0 : index
    %9 = vector.load %arg5[%c0_6, %c0_7] : memref<8x1024xf32, #tpu.memory_space<vmem>>, vector<8x1024xf32>
    tpu.vector_store %arg5[%c0_6, %c0_7], %8 {strides = array<i32>} : memref<8x1024xf32, #tpu.memory_space<vmem>>, vector<8x1024xf32>,
    %c0_i32_8 = arith.constant 0 : i32
    %10 = arith.cmpi eq, %arg1, %c0_i32_8 : i32
    %11 = arith.extui %10 : i1 to i32
    %c0_i32_9 = arith.constant 0 : i32
    %12 = arith.cmpi ne, %11, %c0_i32_9 : i32
    scf.if %12 {
      %c0_10 = arith.constant 0 : index
      %c0_11 = arith.constant 0 : index
      %13 = vector.load %arg5[%c0_10, %c0_11] : memref<8x1024xf32, #tpu.memory_space<vmem>>, vector<8x1024xf32>
      %14 = vector.shape_cast %13 : vector<8x1024xf32> to vector<1x8x1024xf32>
      %cst = arith.constant dense<0.000000e+00> : vector<1xf32>
      %15 = vector.multi_reduction <add>, %14, %cst [1, 2] : vector<1x8x1024xf32> to vector<1xf32>
      %16 = vector.shape_cast %15 : vector<1xf32> to vector<1x1x1xf32>
      %17 = vector.extract %16[0, 0, 0] : f32 from vector<1x1x1xf32>
      %c0_12 = arith.constant 0 : index
      %c0_13 = arith.constant 0 : index
      %18 = memref.load %arg4[%c0_12, %c0_13] : memref<1x1xf32, #tpu.memory_space<smem>>
      memref.store %17, %arg4[%c0_12, %c0_13] : memref<1x1xf32, #tpu.memory_space<smem>>
    } else {
    }
    return
  }
  func.func @transform_0(%arg0: i32, %arg1: i32) -> (i32, i32) {
    %c0_i32 = arith.constant 0 : i32
    return %arg0, %arg1 : i32, i32
  }
  func.func @transform_1(%arg0: i32, %arg1: i32) -> (i32, i32) {
    %c0_i32 = arith.constant 0 : i32
    return %arg0, %arg1 : i32, i32
  }
  func.func @transform_2(%arg0: i32, %arg1: i32) -> (i32, i32) {
    %c0_i32 = arith.constant 0 : i32
    %c0_i32_0 = arith.constant 0 : i32
    return %arg0, %c0_i32 : i32, i32
  }
}

</mosaic_0001>

<llo_original>
// kernel: tpu_custom_call.1
$region0: #{tpu_custom_call.1}
  #allocation0 [shape = 'u32[]', space=smem, size = 0x4, offset = 0x4, fixed_abs, tag = 'smem constant byte address 0x4 - core index']
  #allocation1 [shape = 'u32[144,128]{1,0:T(1,128)}', space=vmem, size = 0x12000, scoped, tag = 'internal scratch']
  #allocation2 [shape = 'f32[8,1024]{1,0:T(8,128)}', space=vmem, size = 0x8000, scoped, tag = 'scratch operand']
  %s0 = inlined_call_operand.hbm [shape: f32[8,1024], index: 0, kind: input, shape index: {}]
  %s1 = inlined_call_operand.hbm [shape: f32[8,1024], index: 1, kind: input, shape index: {}]
  %s2 = inlined_call_operand.hbm [shape: f32[1,1], index: 2, kind: output, shape index: {}]
  %s3 = sld [smem:[#allocation0]]
  $region34: #{tpu_custom_call.1} parent=0
    _
  %s5 = ssub.s32 1, %s3
  %s6 = scalar_select 0, %s5, %s3
  $region1: #{tpu_custom_call.1} parent=0
    #allocation3 [shape = 'u8[32768]{0}', space=vmem, size = 0x8000, scoped, tag = 'input window, operand 0, single buffered']
    #allocation4 [shape = 's32[1]{0}', space=sflag, size = 0x4, scoped, tag = 'scoped memory for tpu_custom_call.1']
    #allocation5 [shape = 's32[1]{0}', space=sflag, size = 0x4, scoped, tag = 'scoped memory for tpu_custom_call.1']
    #allocation6 [shape = 'u8[32768]{0}', space=vmem, size = 0x8000, scoped, tag = 'input window, operand 1, single buffered']
    #allocation7 [shape = 's32[1]{0}', space=sflag, size = 0x4, scoped, tag = 'scoped memory for tpu_custom_call.1']
    #allocation8 [shape = 'u8[512]{0}', space=smem, size = 0x200, scoped, tag = 'output window, operand 0, single buffered']
    %7 = vsyncpa [#allocation4], 0
    %8 = vsyncpa [#allocation7], 0
    %9 = vsyncpa [#allocation5], 0
    // Predicated region
    $region2: #{tpu_custom_call.1} parent=1 // pred_check
      _
    $region3: #{tpu_custom_call.1} parent=1 // pred_check_branch
      %11 = sbr.rel (0) target = $region5
    $region4: #{tpu_custom_call.1} parent=1 // pred_region
      %s13 = ssub.s32 1024, 1024
      %14 = vsyncadd [#allocation4], %s13
      %s16 = sshll.u32 [#allocation3], 4
      %s17 = int_to_ptr.vmem [resolvable:$true] %s16
      %19 = dma.hbm_to_vmem [thread:$0]  %s0, 1024, %s17, [#allocation4]
    $region5: #{tpu_custom_call.1} parent=1 // pred_fallthru
      _
    // Predicated region
    $region6: #{tpu_custom_call.1} parent=1 // pred_check
      _
    $region7: #{tpu_custom_call.1} parent=1 // pred_check_branch
      %21 = sbr.rel (0) target = $region9
    $region8: #{tpu_custom_call.1} parent=1 // pred_region
      %s23 = ssub.s32 1024, 1024
      %24 = vsyncadd [#allocation7], %s23
      %s26 = sshll.u32 [#allocation6], 4
      %s27 = int_to_ptr.vmem [resolvable:$true] %s26
      %29 = dma.hbm_to_vmem [thread:$0]  %s1, 1024, %s27, [#allocation7]
    $region9: #{tpu_custom_call.1} parent=1 // pred_fallthru
      _
    // Predicated region
    $region10: #{tpu_custom_call.1} parent=1 // pred_check
      _
    $region11: #{tpu_custom_call.1} parent=1 // pred_check_branch
      %31 = sbr.rel (0) target = $region13
    $region12: #{tpu_custom_call.1} parent=1 // pred_region
      %32 = dma.done [#allocation4], 1024
    $region13: #{tpu_custom_call.1} parent=1 // pred_fallthru
      _
    // Predicated region
    $region14: #{tpu_custom_call.1} parent=1 // pred_check
      _
    $region15: #{tpu_custom_call.1} parent=1 // pred_check_branch
      %34 = sbr.rel (0) target = $region17
    $region16: #{tpu_custom_call.1} parent=1 // pred_region
      %35 = dma.done [#allocation7], 1024
    $region17: #{tpu_custom_call.1} parent=1 // pred_fallthru
      _
    %p36 = scmp.eq.s32.totalorder 0, 0
    // Predicated region
    $region18: #{tpu_custom_call.1} parent=1 // pred_check
      %p37 = pneg %p36
    $region19: #{tpu_custom_call.1} parent=1 // pred_check_branch
      %39 = sbr.rel (%p37) target = $region21
    $region20: #{tpu_custom_call.1} parent=1 // pred_region
      %40 = vst [vmem:[#allocation2] sm:$0xff] 0.0
      %41 = vst [vmem:[#allocation2 + $0x8] sm:$0xff] 0.0
      %42 = vst [vmem:[#allocation2 + $0x10] sm:$0xff] 0.0
      %43 = vst [vmem:[#allocation2 + $0x18] sm:$0xff] 0.0
      %44 = vst [vmem:[#allocation2 + $0x20] sm:$0xff] 0.0
      %45 = vst [vmem:[#allocation2 + $0x28] sm:$0xff] 0.0
      %46 = vst [vmem:[#allocation2 + $0x30] sm:$0xff] 0.0
      %47 = vst [vmem:[#allocation2 + $0x38] sm:$0xff] 0.0
    $region21: #{tpu_custom_call.1} parent=1 // pred_fallthru
      _
    %v48 = vld [vmem:[#allocation3] sm:$0xff]
    %v49 = vld [vmem:[#allocation3 + $0x8] sm:$0xff]
    %v50 = vld [vmem:[#allocation3 + $0x10] sm:$0xff]
    %v51 = vld [vmem:[#allocation3 + $0x18] sm:$0xff]
    %v52 = vld [vmem:[#allocation3 + $0x20] sm:$0xff]
    %v53 = vld [vmem:[#allocation3 + $0x28] sm:$0xff]
    %v54 = vld [vmem:[#allocation3 + $0x30] sm:$0xff]
    %v55 = vld [vmem:[#allocation3 + $0x38] sm:$0xff]
    %v56 = vld [vmem:[#allocation6] sm:$0xff]
    %v57 = vld [vmem:[#allocation6 + $0x8] sm:$0xff]
    %v58 = vld [vmem:[#allocation6 + $0x10] sm:$0xff]
    %v59 = vld [vmem:[#allocation6 + $0x18] sm:$0xff]
    %v60 = vld [vmem:[#allocation6 + $0x20] sm:$0xff]
    %v61 = vld [vmem:[#allocation6 + $0x28] sm:$0xff]
    %v62 = vld [vmem:[#allocation6 + $0x30] sm:$0xff]
    %v63 = vld [vmem:[#allocation6 + $0x38] sm:$0xff]
    %v64 = vsub.f32 %v48, %v56
    %v65 = vsub.f32 %v49, %v57
    %v66 = vsub.f32 %v50, %v58
    %v67 = vsub.f32 %v51, %v59
    %v68 = vsub.f32 %v52, %v60
    %v69 = vsub.f32 %v53, %v61
    %v70 = vsub.f32 %v54, %v62
    %v71 = vsub.f32 %v55, %v63
    %v72 = vld [vmem:[#allocation2] sm:$0xff]
    %v73 = vld [vmem:[#allocation2 + $0x8] sm:$0xff]
    %v74 = vld [vmem:[#allocation2 + $0x10] sm:$0xff]
    %v75 = vld [vmem:[#allocation2 + $0x18] sm:$0xff]
    %v76 = vld [vmem:[#allocation2 + $0x20] sm:$0xff]
    %v77 = vld [vmem:[#allocation2 + $0x28] sm:$0xff]
    %v78 = vld [vmem:[#allocation2 + $0x30] sm:$0xff]
    %v79 = vld [vmem:[#allocation2 + $0x38] sm:$0xff]
    %v80 = vmul.f32 %v64, %v64
    %v81 = vmul.f32 %v65, %v65
    %v82 = vmul.f32 %v66, %v66
    %v83 = vmul.f32 %v67, %v67
    %v84 = vmul.f32 %v68, %v68
    %v85 = vmul.f32 %v69, %v69
    %v86 = vmul.f32 %v70, %v70
    %v87 = vmul.f32 %v71, %v71
    %v88 = vadd.f32 %v72, %v80
    %v89 = vadd.f32 %v73, %v81
    %v90 = vadd.f32 %v74, %v82
    %v91 = vadd.f32 %v75, %v83
    %v92 = vadd.f32 %v76, %v84
    %v93 = vadd.f32 %v77, %v85
    %v94 = vadd.f32 %v78, %v86
    %v95 = vadd.f32 %v79, %v87
    %96 = vst [vmem:[#allocation2] sm:$0xff] %v88
    %97 = vst [vmem:[#allocation2 + $0x8] sm:$0xff] %v89
    %98 = vst [vmem:[#allocation2 + $0x10] sm:$0xff] %v90
    %99 = vst [vmem:[#allocation2 + $0x18] sm:$0xff] %v91
    %100 = vst [vmem:[#allocation2 + $0x20] sm:$0xff] %v92
    %101 = vst [vmem:[#allocation2 + $0x28] sm:$0xff] %v93
    %102 = vst [vmem:[#allocation2 + $0x30] sm:$0xff] %v94
    %103 = vst [vmem:[#allocation2 + $0x38] sm:$0xff] %v95
    // Predicated region
    $region22: #{tpu_custom_call.1} parent=1 // pred_check
      %p104 = pneg %p36
    $region23: #{tpu_custom_call.1} parent=1 // pred_check_branch
      %106 = sbr.rel (%p104) target = $region25
    $region24: #{tpu_custom_call.1} parent=1 // pred_region
      %v107 = vld [vmem:[#allocation2] sm:$0xff]
      %v108 = vld [vmem:[#allocation2 + $0x8] sm:$0xff]
      %v109 = vld [vmem:[#allocation2 + $0x10] sm:$0xff]
      %v110 = vld [vmem:[#allocation2 + $0x18] sm:$0xff]
      %v111 = vld [vmem:[#allocation2 + $0x20] sm:$0xff]
      %v112 = vld [vmem:[#allocation2 + $0x28] sm:$0xff]
      %v113 = vld [vmem:[#allocation2 + $0x30] sm:$0xff]
      %v114 = vld [vmem:[#allocation2 + $0x38] sm:$0xff]
      %v115 = vadd.f32 %v107, %v108
      %v116 = vadd.f32 %v115, %v109
      %v117 = vadd.f32 %v116, %v110
      %v118 = vadd.f32 %v117, %v111
      %v119 = vadd.f32 %v118, %v112
      %v120 = vadd.f32 %v119, %v113
      %v121 = vadd.f32 %v120, %v114
      %122 = vadd.xlane.f32.xlu0 %v121
      %v123 = vpop.xlane.xlu0 %122
      %v124 = vrot.slane %v123, 4
      %v125 = vadd.f32 %v123, %v124
      %v126 = vrot.slane %v125, 2
      %v127 = vadd.f32 %v125, %v126
      %v128 = vrot.slane %v127, 1
      %v129 = vadd.f32 %v127, %v128
      %s130 = vtos %v129
      %s131 = scalar_lea.smem [#allocation8], 0
      %132 = sst [smem:[%s131]] %s130
    $region25: #{tpu_custom_call.1} parent=1 // pred_fallthru
      _
    // Predicated region
    $region26: #{tpu_custom_call.1} parent=1 // pred_check
      _
    $region27: #{tpu_custom_call.1} parent=1 // pred_check_branch
      %134 = sbr.rel (0) target = $region29
    $region28: #{tpu_custom_call.1} parent=1 // pred_region
      %s136 = ssub.s32 16, 16
      %137 = vsyncadd [#allocation5], %s136
      %140 = dma.smem_to_hbm [#allocation8], 16, %s2, [#allocation5]
    $region29: #{tpu_custom_call.1} parent=1 // pred_fallthru
      _
    // Predicated region
    $region30: #{tpu_custom_call.1} parent=1 // pred_check
      _
    $region31: #{tpu_custom_call.1} parent=1 // pred_check_branch
      %142 = sbr.rel (0) target = $region33
    $region32: #{tpu_custom_call.1} parent=1 // pred_region
      %143 = dma.done [#allocation5], 16
    $region33: #{tpu_custom_call.1} parent=1 // pred_fallthru
      _
    %144 = sfence
    %145 = vsyncpa [#allocation4], 1
    %146 = vsyncpa [#allocation7], 1
    %147 = vsyncpa [#allocation5], 1

</llo_original>
